<compile_context>
chip_gen: v6e
topology: v6e:2x2x1
jax: 0.10.0
libtpu: 0.0.40
codegen_flags: <defaults>
</compile_context>

<pallas_src>
import functools

import numpy as np
import jax
import jax.numpy as jnp
from jax.experimental import pallas as pl
from jax.experimental.pallas import tpu as pltpu

_MASK = -1e30  # finite "minus infinity" for padded vocab columns (exp() -> 0)


def _round_up(x, m):
    return (x + m - 1) // m * m


# --------------------------------------------------------------------------- #
# Kernels
# --------------------------------------------------------------------------- #

def _fused_kernel(x_ref, w_ref, b_ref, o_ref):
    """Single vocab tile: logits + log_softmax fully in VMEM, one weight pass."""
    x_bf = x_ref[...].astype(w_ref.dtype)
    logits = jnp.dot(x_bf, w_ref[...], preferred_element_type=jnp.float32)
    logits = logits + b_ref[...]
    m = jnp.max(logits, axis=-1, keepdims=True)
    lse = m + jnp.log(jnp.sum(jnp.exp(logits - m), axis=-1, keepdims=True))
    o_ref[...] = (logits - lse).astype(o_ref.dtype)


def _logits_lse_kernel(x_ref, w_ref, b_ref, logits_ref, lse_ref,
                       xbf_ref, m_ref, l_ref):
    """Streaming pass: unnormalized logits written out, online logsumexp per row.

    grid = (row tiles ["parallel"], vocab tiles ["arbitrary"]).
    The weight is streamed through VMEM exactly once per row tile; there is no
    second matmul pass.
    """
    j = pl.program_id(1)

    @pl.when(j == 0)
    def _init():
        # Cast the resident activation row tile to bf16 once per row tile
        # (avoids a full XLA-side astype round trip of x through HBM).
        xbf_ref[...] = x_ref[...].astype(xbf_ref.dtype)
        m_ref[...] = jnp.full(m_ref.shape, -jnp.inf, dtype=m_ref.dtype)
        l_ref[...] = jnp.zeros(l_ref.shape, dtype=l_ref.dtype)

    # bf16 x bf16 -> f32 on the MXU; bias add fused in f32.
    logits = jnp.dot(xbf_ref[...], w_ref[...], preferred_element_type=jnp.float32)
    logits = logits + b_ref[...]
    logits_ref[...] = logits.astype(logits_ref.dtype)

    # Flash-style running max / sum-exp.
    m_prev = m_ref[...]
    m_new = jnp.maximum(m_prev, jnp.max(logits, axis=-1, keepdims=True))
    l_ref[...] = l_ref[...] * jnp.exp(m_prev - m_new) + jnp.sum(
        jnp.exp(logits - m_new), axis=-1, keepdims=True)
    m_ref[...] = m_new

    @pl.when(j == pl.num_programs(1) - 1)
    def _finalize():
        lse_ref[...] = m_ref[...] + jnp.log(l_ref[...])


def _subtract_lse_kernel(logits_ref, lse_ref, o_ref):
    """Elementwise fixup: log_softmax = logits - logsumexp (no matmul recompute)."""
    o_ref[...] = (logits_ref[...] - lse_ref[...]).astype(o_ref.dtype)


# --------------------------------------------------------------------------- #
# Wrapper
# --------------------------------------------------------------------------- #

def prepare_generator_params(weight, bias, *, compute_dtype=jnp.bfloat16):
    """One-time parameter prep (at init, NOT per forward call).

    PyTorch-style weight (vocab, d_model) -> (d_model, vocab) in compute dtype;
    bias -> (1, vocab) f32.
    """
    # TODO(synk): optional fp8 weight storage (v7x) with per-column scales.
    w_t = jnp.asarray(weight).T.astype(compute_dtype)
    b2d = jnp.asarray(bias).astype(jnp.float32).reshape(1, -1)
    return w_t, b2d


def _vmem_limit_bytes():
    """Generation-aware VMEM limit: capacity - 16 MiB headroom for Mosaic."""
    try:
        cap = int(pltpu.get_tpu_info().vmem_capacity_bytes)
    except Exception:
        cap = 64 * 1024 * 1024  # conservative fallback (safe on every generation)
    return max(32 * 1024 * 1024, cap - 16 * 1024 * 1024)


@functools.partial(jax.jit, static_argnames=("tile_n", "tile_v", "out_dtype"))
def generator_forward(x, w_t, bias2d, *, tile_n=1024, tile_v=2048, out_dtype=None):
    """x: (B, S, d_model); w_t: (d_model, vocab) bf16; bias2d: (1, vocab) f32."""
    B, S, d_model = x.shape
    d_model_w, vocab = w_t.shape
    assert d_model_w == d_model
    out_dtype = np.dtype(x.dtype) if out_dtype is None else np.dtype(out_dtype)

    x_bytes = x.dtype.itemsize
    w_bytes = w_t.dtype.itemsize
    out_bytes = out_dtype.itemsize
    N = B * S

    vmem_limit = _vmem_limit_bytes()
    budget = vmem_limit - 4 * 1024 * 1024  # slack for Mosaic internal scratch

    # ---- row tiling: amortize the streamed weight; >= 2 row tiles for v7x TCs ----
    if N <= 256:
        tile_n = max(16, min(tile_n, _round_up(N, 16)))
    else:
        n_tiles_target = max(2, pl.cdiv(N, tile_n))
        tile_n = _round_up(pl.cdiv(N, n_tiles_target), 16)

    # ---- vocab tiling ----
    v_full = _round_up(vocab, 128)
    tile_v = _round_up(min(tile_v, v_full), 128)

    def vmem_estimate(tn, tv):
        return (2 * tn * d_model * x_bytes     # x row tile (double buffered)
                + 2 * d_model * tv * w_bytes   # weight tile (double buffered)
                + 2 * tv * 4                   # bias tile
                + 2 * tn * tv * 4              # logits/out tile (f32, worst case)
                + 2 * tn * 4                   # lse tile
                + tn * d_model * w_bytes)      # bf16 x scratch

    # Walk a (tile_n, tile_v) ladder until the double-buffered tiles fit VMEM.
    while vmem_estimate(tile_n, tile_v) > budget:
        if tile_n > 512:
            tile_n = _round_up(tile_n // 2, 16)
        elif tile_v > 512:
            tile_v = _round_up(tile_v // 2, 128)
        elif tile_n > 128:
            tile_n = _round_up(tile_n // 2, 16)
        elif tile_v > 128:
            tile_v = _round_up(tile_v // 2, 128)
        elif tile_n > 16:
            tile_n = _round_up(tile_n // 2, 16)
        else:
            break

    fused = tile_v >= v_full
    if fused:
        tile_v = v_full
    v_pad = _round_up(vocab, tile_v)
    n_pad = _round_up(N, tile_n)
    n_tiles = n_pad // tile_n
    v_tiles = v_pad // tile_v

    # ---- padded operands (padded vocab columns: zero weight, -1e30 bias) ----
    x2d = x.reshape(N, d_model)
    if n_pad != N:
        x2d = jnp.pad(x2d, ((0, n_pad - N), (0, 0)))
    w = w_t
    b = bias2d
    if v_pad != vocab:
        w = jnp.pad(w_t, ((0, 0), (0, v_pad - vocab)))
        b = jnp.pad(bias2d, ((0, 0), (0, v_pad - vocab)), constant_values=_MASK)

    compiler_params = lambda sem: pltpu.CompilerParams(
        dimension_semantics=sem, vmem_limit_bytes=vmem_limit)

    if fused:
        # -------- fused single-pass path: whole vocab row resident in VMEM --------
        cost = pl.CostEstimate(
            flops=2 * n_pad * d_model * v_pad,
            transcendentals=n_pad * v_pad + n_pad,
            bytes_accessed=(x2d.size * x_bytes + w.size * w_bytes + b.size * 4
                            + n_pad * v_pad * out_bytes),
        )
        out2d = pl.pallas_call(
            _fused_kernel,
            out_shape=jax.ShapeDtypeStruct((n_pad, v_pad), out_dtype),
            grid_spec=pltpu.PrefetchScalarGridSpec(
                num_scalar_prefetch=0,
                grid=(n_tiles,),
                in_specs=[
                    pl.BlockSpec((tile_n, d_model), lambda i: (i, 0)),
                    pl.BlockSpec((d_model, v_pad), lambda i: (0, 0)),
                    pl.BlockSpec((1, v_pad), lambda i: (0, 0)),
                ],
                out_specs=pl.BlockSpec((tile_n, v_pad), lambda i: (i, 0)),
            ),
            compiler_params=compiler_params(("parallel",)),
            cost_estimate=cost,
        )(x2d, w, b)
    else:
        # -------- streaming path: single matmul pass + elementwise fixup --------
        cost1 = pl.CostEstimate(
            flops=2 * n_pad * d_model * v_pad,
            transcendentals=n_pad * v_pad + n_pad,
            bytes_accessed=(x2d.size * x_bytes
                            + n_tiles * w.size * w_bytes
                            + n_tiles * b.size * 4
                            + n_pad * v_pad * 4 + n_pad * 4),
        )
        logits, lse = pl.pallas_call(
            _logits_lse_kernel,
            out_shape=(jax.ShapeDtypeStruct((n_pad, v_pad), jnp.float32),
                       jax.ShapeDtypeStruct((n_pad, 1), jnp.float32)),
            grid_spec=pltpu.PrefetchScalarGridSpec(
                num_scalar_prefetch=0,
                grid=(n_tiles, v_tiles),
                in_specs=[
                    # x row tile: resident across the vocab sweep.
                    pl.BlockSpec((tile_n, d_model), lambda i, j: (i, 0)),
                    # weight / bias: streamed along the vocab axis (Buffered(2)).
                    pl.BlockSpec((d_model, tile_v), lambda i, j: (0, j)),
                    pl.BlockSpec((1, tile_v), lambda i, j: (0, j)),
                ],
                out_specs=(
                    pl.BlockSpec((tile_n, tile_v), lambda i, j: (i, j)),
                    pl.BlockSpec((tile_n, 1), lambda i, j: (i, 0)),
                ),
                scratch_shapes=[
                    pltpu.VMEM((tile_n, d_model), w.dtype),  # bf16 x row tile
                    pltpu.VMEM((tile_n, 1), jnp.float32),    # running max
                    pltpu.VMEM((tile_n, 1), jnp.float32),    # running sum-exp
                ],
            ),
            compiler_params=compiler_params(("parallel", "arbitrary")),
            cost_estimate=cost1,
        )(x2d, w, b)

        # Fixup kernel: out = logits - lse, in-place over the intermediate buffer
        # when dtypes allow (input_output_aliases), purely memory bound.
        aliases = {0: 0} if out_dtype == np.dtype(jnp.float32) else {}
        out2d = pl.pallas_call(
            _subtract_lse_kernel,
            out_shape=jax.ShapeDtypeStruct((n_pad, v_pad), out_dtype),
            grid_spec=pltpu.PrefetchScalarGridSpec(
                num_scalar_prefetch=0,
                grid=(n_tiles, v_tiles),
                in_specs=[
                    pl.BlockSpec((tile_n, tile_v), lambda i, j: (i, j)),
                    pl.BlockSpec((tile_n, 1), lambda i, j: (i, 0)),
                ],
                out_specs=pl.BlockSpec((tile_n, tile_v), lambda i, j: (i, j)),
            ),
            compiler_params=compiler_params(("parallel", "parallel")),
            input_output_aliases=aliases,
        )(logits, lse)

    return out2d[:N, :vocab].reshape(B, S, vocab)


# --------------------------------------------------------------------------- #
# Demo / correctness check
# --------------------------------------------------------------------------- #

if __name__ == "__main__":
    def reference(x, w_t, b2d):
        # Same math as the kernel: bf16 matmul inputs, f32 accumulate / softmax.
        logits = jnp.dot(x.astype(w_t.dtype), w_t,
                         preferred_element_type=jnp.float32) + b2d[0]
        return jax.nn.log_softmax(logits, axis=-1)

    root = jax.random.PRNGKey(0)
    k1, k2 = jax.random.split(root)

    # Case 1: small vocab -> fused single-pass path (one vocab tile, vocab padding).
    B, S, d_model, vocab = 2, 8, 32, 100
    kx, kw, kb = jax.random.split(k1, 3)
    bound = 1.0 / (d_model ** 0.5)
    x = jax.random.normal(kx, (B, S, d_model), dtype=jnp.float32)
    weight = jax.random.uniform(kw, (vocab, d_model), jnp.float32, -bound, bound)
    bias = jax.random.uniform(kb, (vocab,), jnp.float32, -bound, bound)
    w_t, b2d = prepare_generator_params(weight, bias)
    out = jax.block_until_ready(generator_forward(x, w_t, b2d))
    ref = reference(x, w_t, b2d)
    assert out.shape == (B, S, vocab)
    err = float(jnp.max(jnp.abs(out - ref)))
    assert err < 2e-3, f"fused path max err {err}"

    # Case 2: forced small tiles -> streaming path (multiple vocab tiles, online
    # logsumexp, fixup kernel with in-place aliasing, row + vocab padding).
    B, S, d_model, vocab = 2, 15, 64, 500
    kx, kw, kb = jax.random.split(k2, 3)
    bound = 1.0 / (d_model ** 0.5)
    x = jax.random.normal(kx, (B, S, d_model), dtype=jnp.float32)
    weight = jax.random.uniform(kw, (vocab, d_model), jnp.float32, -bound, bound)
    bias = jax.random.uniform(kb, (vocab,), jnp.float32, -bound, bound)
    w_t, b2d = prepare_generator_params(weight, bias)
    out = jax.block_until_ready(
        generator_forward(x, w_t, b2d, tile_n=16, tile_v=128))
    ref = reference(x, w_t, b2d)
    assert out.shape == (B, S, vocab)
    err = float(jnp.max(jnp.abs(out - ref)))
    assert err < 2e-3, f"streaming path max err {err}"

    print("KERNEL_OK")
</pallas_src>

<mosaic_0001>
module attributes {stable_mosaic.version = 11 : i64} {
  func.func @_fused_kernel(%arg0: i32, %arg1: memref<16x32xf32, #tpu.memory_space<vmem>>, %arg2: memref<32x128xbf16, #tpu.memory_space<vmem>>, %arg3: memref<1x128xf32, #tpu.memory_space<vmem>>, %arg4: memref<16x128xf32, #tpu.memory_space<vmem>>) attributes {dimension_semantics = [#tpu.dimension_semantics<parallel>], iteration_bounds = array<i64: 1>, scalar_prefetch = 0 : i64, scratch_operands = 0 : i64, tpu.core_type = #tpu.core_type<tc>, window_params = [{transform_indices = @transform_0, window_bounds = array<i64: 16, 32>}, {pipeline_mode = #tpu.pipeline_mode<synchronous>, transform_indices = @transform_1, window_bounds = array<i64: 32, 128>}, {pipeline_mode = #tpu.pipeline_mode<synchronous>, transform_indices = @transform_2, window_bounds = array<i64: 1, 128>}, {transform_indices = @transform_3, window_bounds = array<i64: 16, 128>}]} {
    %c0 = arith.constant 0 : index
    %c0_0 = arith.constant 0 : index
    %0 = vector.load %arg1[%c0, %c0_0] : memref<16x32xf32, #tpu.memory_space<vmem>>, vector<16x32xf32>
    %1 = arith.truncf %0 : vector<16x32xf32> to vector<16x32xbf16>
    %c0_1 = arith.constant 0 : index
    %c0_2 = arith.constant 0 : index
    %2 = vector.load %arg2[%c0_1, %c0_2] : memref<32x128xbf16, #tpu.memory_space<vmem>>, vector<32x128xbf16>
    %cst = arith.constant dense<0.000000e+00> : vector<16x128xf32>
    %3 = tpu.matmul %1, %2, %cst {dimension_numbers = #tpu.dot_dimension_numbers<[1], [0], [0], [1], [0, 0, 1, 1], [], []>} : vector<16x32xbf16>, vector<32x128xbf16>, vector<16x128xf32> -> vector<16x128xf32>
    %c0_3 = arith.constant 0 : index
    %c0_4 = arith.constant 0 : index
    %4 = vector.load %arg3[%c0_3, %c0_4] : memref<1x128xf32, #tpu.memory_space<vmem>>, vector<1x128xf32>
    %5 = vector.broadcast %4 : vector<1x128xf32> to vector<16x128xf32>
    %6 = arith.addf %3, %5 : vector<16x128xf32>
    %cst_5 = arith.constant dense<0xFF800000> : vector<16xf32>
    %7 = vector.multi_reduction <maximumf>, %6, %cst_5 [1] : vector<16x128xf32> to vector<16xf32>
    %8 = vector.shape_cast %7 : vector<16xf32> to vector<16x1xf32>
    %9 = vector.broadcast %8 : vector<16x1xf32> to vector<16x128xf32>
    %10 = arith.subf %6, %9 : vector<16x128xf32>
    %11 = math.exp %10 : vector<16x128xf32>
    %cst_6 = arith.constant dense<0.000000e+00> : vector<16xf32>
    %12 = vector.multi_reduction <add>, %11, %cst_6 [1] : vector<16x128xf32> to vector<16xf32>
    %13 = vector.shape_cast %12 : vector<16xf32> to vector<16x1xf32>
    %14 = math.log %13 : vector<16x1xf32>
    %15 = arith.addf %8, %14 : vector<16x1xf32>
    %16 = vector.broadcast %15 : vector<16x1xf32> to vector<16x128xf32>
    %17 = arith.subf %6, %16 : vector<16x128xf32>
    %c0_7 = arith.constant 0 : index
    %c0_8 = arith.constant 0 : index
    %18 = vector.load %arg4[%c0_7, %c0_8] : memref<16x128xf32, #tpu.memory_space<vmem>>, vector<16x128xf32>
    tpu.vector_store %arg4[%c0_7, %c0_8], %17 {strides = array<i32>} : memref<16x128xf32, #tpu.memory_space<vmem>>, vector<16x128xf32>,
    return
  }
  func.func @transform_0(%arg0: i32) -> (i32, i32) {
    %c0_i32 = arith.constant 0 : i32
    %c0_i32_0 = arith.constant 0 : i32
    return %arg0, %c0_i32 : i32, i32
  }
  func.func @transform_1(%arg0: i32) -> (i32, i32) {
    %c0_i32 = arith.constant 0 : i32
    %c0_i32_0 = arith.constant 0 : i32
    %c0_i32_1 = arith.constant 0 : i32
    return %c0_i32, %c0_i32_0 : i32, i32
  }
  func.func @transform_2(%arg0: i32) -> (i32, i32) {
    %c0_i32 = arith.constant 0 : i32
    %c0_i32_0 = arith.constant 0 : i32
    %c0_i32_1 = arith.constant 0 : i32
    return %c0_i32, %c0_i32_0 : i32, i32
  }
  func.func @transform_3(%arg0: i32) -> (i32, i32) {
    %c0_i32 = arith.constant 0 : i32
    %c0_i32_0 = arith.constant 0 : i32
    return %arg0, %c0_i32 : i32, i32
  }
}

</mosaic_0001>

<llo_original>
// kernel: generator_forward.1
$region0: #{generator_forward.1}
  #allocation0 [shape = 'u32[]', space=smem, size = 0x4, offset = 0x4, fixed_abs, tag = 'smem constant byte address 0x4 - core index']
  #allocation1 [shape = 'u32[144,128]{1,0:T(1,128)}', space=vmem, size = 0x12000, scoped, tag = 'internal scratch']
  %s0 = inlined_call_operand.vmem [shape: f32[16,32], index: 0, kind: input, shape index: {}]
  %s1 = inlined_call_operand.vmem [shape: bf16[32,128], index: 1, kind: input, shape index: {}]
  %s2 = inlined_call_operand.vmem [shape: f32[1,128], index: 2, kind: input, shape index: {}]
  %s3 = inlined_call_operand.vmem [shape: f32[16,128], index: 3, kind: output, shape index: {}]
  %s4 = sld [smem:[#allocation0]]
  $region22: #{generator_forward.1} parent=0
    _
  %s6 = ssub.s32 1, %s4
  %s7 = scalar_select 0, %s6, %s4
  // Predicated region
  $region2: #{generator_forward.1} parent=0 // pred_check
    _
  $region3: #{generator_forward.1} parent=0 // pred_check_branch
    %9 = sbr.rel (0) target = $region5
  $region4: #{generator_forward.1} parent=0 // pred_region
    _
  $region5: #{generator_forward.1} parent=0 // pred_fallthru
    _
  // Predicated region
  $region6: #{generator_forward.1} parent=0 // pred_check
    _
  $region7: #{generator_forward.1} parent=0 // pred_check_branch
    %11 = sbr.rel (0) target = $region9
  $region8: #{generator_forward.1} parent=0 // pred_region
    _
  $region9: #{generator_forward.1} parent=0 // pred_fallthru
    _
  // Predicated region
  $region10: #{generator_forward.1} parent=0 // pred_check
    _
  $region11: #{generator_forward.1} parent=0 // pred_check_branch
    %13 = sbr.rel (0) target = $region13
  $region12: #{generator_forward.1} parent=0 // pred_region
    _
  $region13: #{generator_forward.1} parent=0 // pred_fallthru
    _
  %v15 = vld [vmem:[%s0] sm:$0xff]
  %v16 = vld [vmem:[%s0 + $0x8] sm:$0xff]
  %v17 = vpack.c.bf16 %v16, %v15
  %v18 = vld [vmem:[%s1] sm:$0xf]
  %v19 = vld [vmem:[%s1 + $0x4] sm:$0xf]
  %v20 = vld [vmem:[%s1 + $0x8] sm:$0xf]
  %v21 = vld [vmem:[%s1 + $0xc] sm:$0xf]
  %v22 = vld [vmem:[%s2] sm:$0x1]
  %v24 = vlaneseq
  %v25 = vshrl.u32 %v24, 7
  %v26 = vsub.s32 0, %v25
  %v27 = vrot.slane %v22, %v26
  %v33 = vunpack.c.l.b16 %v18
  %v34 = vunpack.c.l.b16 %v19
  %v35 = vunpack.c.l.b16 %v20
  %v36 = vunpack.c.l.b16 %v21
  %v37 = vpack.c.b16 %v34, %v33
  %v38 = vpack.c.b16 %v36, %v35
  %vm41 = vcmask 261120
  %v43 = vsel %vm41, %v17, 0
  %45 = vmatprep.subr.bf16.mxu0 0
  %46 = vmatpush1.bf16.msra.mxu0 0
  %47 = vmatprep.subr.bf16.mxu0 0
  %48 = vmatpush1.bf16.msra.mxu0 0
  %49 = vmatprep.subr.bf16.mxu0 0
  %50 = vmatpush1.bf16.msra.mxu0 0
  %51 = vmatprep.subr.bf16.mxu0 0
  %52 = vmatpush1.bf16.msra.mxu0 0
  %53 = vmatprep.subr.bf16.mxu0 0
  %54 = vmatpush1.bf16.msra.mxu0 0
  %55 = vmatprep.subr.bf16.mxu0 0
  %56 = vmatpush1.bf16.msra.mxu0 0
  %57 = vmatprep.subr.bf16.mxu0 0
  %58 = vmatpush1.bf16.msra.mxu0 %v38
  %59 = vmatprep.subr.bf16.mxu0 0
  %60 = vmatpush1.bf16.msra.mxu0 %v37
  %61 = vmatprep.subr.bf16.mxu0 0
  %62 = vmatpush2.bf16.msra.mxu0 0
  %63 = vmatprep.subr.bf16.mxu0 0
  %64 = vmatpush2.bf16.msra.mxu0 0
  %65 = vmatprep.subr.bf16.mxu0 0
  %66 = vmatpush2.bf16.msra.mxu0 0
  %67 = vmatprep.subr.bf16.mxu0 0
  %68 = vmatpush2.bf16.msra.mxu0 0
  %69 = vmatprep.subr.bf16.mxu0 0
  %70 = vmatpush2.bf16.msra.mxu0 0
  %71 = vmatprep.subr.bf16.mxu0 0
  %72 = vmatpush2.bf16.msra.mxu0 0
  %73 = vmatprep.subr.bf16.mxu0 0
  %74 = vmatpush2.bf16.msra.mxu0 0
  %75 = vmatprep.subr.bf16.mxu0 0
  %76 = vmatpush2.bf16.msra.mxu0 0
  %77 = vmatprep.mubr.bf16.mxu0 0
  %78 = vmatmul.mubr.bf16.gmra.mxu0 %v43
  %v79 = vpop.f32.mrf.mxu0
  %v80 = vadd.f32 %v27, %v79
  %v81 = vpop.f32.mrf.mxu0
  %v82 = vpop.f32.mrf.mxu0
  %v83 = vadd.f32 %v27, %v82
  %v84 = vpop.f32.mrf.mxu0
  %85 = vdwg.mxu0
  %86 = vmax.xlane.f32.xlu0 %v80
  %v87 = vpop.xlane.xlu0 %86
  %88 = vmax.xlane.f32.xlu0 %v83
  %v89 = vpop.xlane.xlu0 %88
  %v90 = vsub.f32 %v80, %v87
  %v91 = vsub.f32 %v83, %v89
  %v92 = vmul.f32 %v90, 1.442695
  %v93 = vpow.pop %v92
  %v94 = vmul.f32 %v91, 1.442695
  %v95 = vpow.pop %v94
  %96 = vadd.xlane.f32.xlu0 %v93
  %v97 = vpop.xlane.xlu0 %96
  %98 = vadd.xlane.f32.xlu0 %v95
  %v99 = vpop.xlane.xlu0 %98
  %v100 = vlog2.pop %v97
  %v101 = vmul.f32 %v100, 0.6931472
  %v102 = vlog2.pop %v99
  %v103 = vmul.f32 %v102, 0.6931472
  %v104 = vadd.f32 %v87, %v101
  %v105 = vadd.f32 %v89, %v103
  %v106 = vsub.f32 %v80, %v104
  %v107 = vsub.f32 %v83, %v105
  %108 = vst [vmem:[%s3] sm:$0xff] %v106
  %109 = vst [vmem:[%s3 + $0x8] sm:$0xff] %v107
  // Predicated region
  $region14: #{generator_forward.1} parent=0 // pred_check
    _
  $region15: #{generator_forward.1} parent=0 // pred_check_branch
    %111 = sbr.rel (0) target = $region17
  $region16: #{generator_forward.1} parent=0 // pred_region
    _
  $region17: #{generator_forward.1} parent=0 // pred_fallthru
    _
  // Predicated region
  $region18: #{generator_forward.1} parent=0 // pred_check
    _
  $region19: #{generator_forward.1} parent=0 // pred_check_branch
    %113 = sbr.rel (0) target = $region21
  $region20: #{generator_forward.1} parent=0 // pred_region
    _
  $region21: #{generator_forward.1} parent=0 // pred_fallthru
    _

</llo_original>
